<compile_context>
chip_gen: v5e
topology: v5e:2x2
jax: 0.10.0
libtpu: 0.0.40
codegen_flags: <defaults>
</compile_context>

<pallas_src>
from math import ceil

import jax
import jax.numpy as jnp
from jax import lax
from jax.experimental import pallas as pl
from jax.experimental.pallas import tpu as pltpu


def _round_up(x, mult):
    return ((x + mult - 1) // mult) * mult


# --------------------------- tiled linear projection ---------------------------

def _matmul_kernel(x_ref, w_ref, o_ref, acc_ref):
    @pl.when(pl.program_id(2) == 0)
    def _init():
        acc_ref[...] = jnp.zeros_like(acc_ref)

    acc_ref[...] += jnp.dot(x_ref[...], w_ref[...],
                            preferred_element_type=jnp.float32)

    @pl.when(pl.program_id(2) == pl.num_programs(2) - 1)
    def _done():
        o_ref[...] = acc_ref[...].astype(o_ref.dtype)


def _matmul_bias_kernel(x_ref, w_ref, b_ref, o_ref, acc_ref):
    @pl.when(pl.program_id(2) == 0)
    def _init():
        acc_ref[...] = jnp.zeros_like(acc_ref)

    acc_ref[...] += jnp.dot(x_ref[...], w_ref[...],
                            preferred_element_type=jnp.float32)

    @pl.when(pl.program_id(2) == pl.num_programs(2) - 1)
    def _done():
        o_ref[...] = (acc_ref[...] + b_ref[...]).astype(o_ref.dtype)


def linear_pallas(x2d, w, b=None, *, out_dtype=jnp.float32,
                  tm=512, tn=256, tk=512):
    """(M, K) @ (K, N) [+ b]: bf16 operands, f32 accumulation, tiled grid."""
    M, K = x2d.shape
    K2, N = w.shape
    assert K == K2
    tm = min(tm, _round_up(M, 8))
    tn = min(tn, _round_up(N, 128))
    tk = min(tk, _round_up(K, 128))
    Mp, Np, Kp = _round_up(M, tm), _round_up(N, tn), _round_up(K, tk)

    xp = jnp.pad(x2d, ((0, Mp - M), (0, Kp - K))).astype(jnp.bfloat16)
    wp = jnp.pad(w, ((0, Kp - K), (0, Np - N))).astype(jnp.bfloat16)

    in_specs = [
        pl.BlockSpec((tm, tk), lambda i, j, k: (i, k)),
        pl.BlockSpec((tk, tn), lambda i, j, k: (k, j)),
    ]
    operands = [xp, wp]
    kernel = _matmul_kernel
    if b is not None:
        bp = jnp.pad(b.reshape(1, N), ((0, 0), (0, Np - N))).astype(jnp.float32)
        in_specs.append(pl.BlockSpec((1, tn), lambda i, j, k: (0, j)))
        operands.append(bp)
        kernel = _matmul_bias_kernel

    out = pl.pallas_call(
        kernel,
        out_shape=jax.ShapeDtypeStruct((Mp, Np), out_dtype),
        grid=(Mp // tm, Np // tn, Kp // tk),
        in_specs=in_specs,
        out_specs=pl.BlockSpec((tm, tn), lambda i, j, k: (i, j)),
        scratch_shapes=[pltpu.VMEM((tm, tn), jnp.float32)],
        compiler_params=pltpu.CompilerParams(
            dimension_semantics=("parallel", "parallel", "arbitrary")),
    )(*operands)
    return out[:M, :N]


# --------------------------- Nystrom attention kernels ---------------------------

def make_attention_kernels(H, N, D, m, ks, conv_pad, iters):
    f32 = jnp.float32
    bf16 = jnp.bfloat16
    inner = H * D

    def dot_bf(a, b):                       # bf16 operands, f32 accumulate (MXU)
        return jnp.dot(a.astype(bf16), b.astype(bf16),
                       preferred_element_type=f32)

    def dot_bf_rhs_t(a, b):                 # a @ b.T, contracting last dims
        return lax.dot_general(a.astype(bf16), b.astype(bf16),
                               (((1,), (1,)), ((), ())),
                               preferred_element_type=f32)

    def _split(a):
        hi = a.astype(bf16)
        lo = (a - hi.astype(f32)).astype(bf16)
        return hi, lo

    def dot_3x(a, b):
        # ~Precision.HIGH: 3-pass bf16 decomposition, f32 accumulation. Used for
        # the accuracy-critical attn2 / Newton-Schulz matmuls (half the MXU
        # passes of Precision.HIGHEST, guaranteed Mosaic lowering).
        ah, al = _split(a)
        bh, bl = _split(b)
        mm = lambda x, y: jnp.dot(x, y, preferred_element_type=f32)
        return mm(ah, bh) + mm(ah, bl) + mm(al, bh)

    def dot_3x_rhs_t(a, b):
        ah, al = _split(a)
        bh, bl = _split(b)
        mm = lambda x, y: lax.dot_general(x, y, (((1,), (1,)), ((), ())),
                                          preferred_element_type=f32)
        return mm(ah, bh) + mm(ah, bl) + mm(al, bh)

    def softmax_rows(x, approx):
        x = x - jnp.max(x, axis=-1, keepdims=True)
        e = jnp.exp(x)
        s = jnp.sum(e, axis=-1, keepdims=True)
        if approx:
            return e * pl.reciprocal(s, approx=True)
        return e / s

    def softmax_cols(x):                    # softmax along axis 0 (yields attn2^T)
        x = x - jnp.max(x, axis=0, keepdims=True)
        e = jnp.exp(x)
        return e / jnp.sum(e, axis=0, keepdims=True)

    # ---- pass 1: per-batch |attn2| col/row-sum maxima from the tiny landmark tensor ----
    def denom_kernel(qkl_ref, maxc_ref, maxr_ref):
        qkl = qkl_ref[0]                                   # (m, 2*H*D) f32
        maxc = jnp.zeros((1, 1), f32)
        maxr = jnp.zeros((1, 1), f32)
        for h in range(H):
            q_l = qkl[:, h * D:(h + 1) * D]
            k_l = qkl[:, inner + h * D: inner + (h + 1) * D]
            a2 = softmax_rows(dot_3x_rhs_t(q_l, k_l), approx=False)   # (m, m)
            ab = jnp.abs(a2)
            cs = jnp.sum(ab, axis=-1, keepdims=True)       # (m, 1)
            rs = jnp.sum(ab, axis=-2, keepdims=True)       # (1, m)
            maxc = jnp.maximum(maxc, jnp.max(cs, axis=0, keepdims=True))
            maxr = jnp.maximum(maxr, jnp.max(rs, axis=1, keepdims=True))
        maxc_ref[0] = jnp.broadcast_to(maxc, (8, 128))
        maxr_ref[0] = jnp.broadcast_to(maxr, (8, 128))

    # ---- pass 2: attention + Newton-Schulz pinv + residual depthwise conv ----
    def attn_kernel(qkv_ref, qkl_ref, wtap_ref, eye_ref, denom_ref, o_ref,
                    vpad_ref):
        qkv = qkv_ref[0]                                   # (N, 3*H*D) bf16
        qkl = qkl_ref[0]                                   # (m, 2*H*D) f32
        I_m = eye_ref[...]                                 # (m, m) f32
        inv_denom = 1.0 / denom_ref[0, 0]

        q_all = qkv[:, 0 * inner:1 * inner]                # scale folded into W_q
        k_all = qkv[:, 1 * inner:2 * inner]
        v_all = qkv[:, 2 * inner:3 * inner]

        # Residual depthwise conv over ALL heads at once (lane-dense (N, H*D)
        # slab, f32 accumulate). Only the zero-pad edge rows are re-zeroed.
        vpad_ref[0:conv_pad, :] = jnp.zeros((conv_pad, inner), f32)
        vpad_ref[conv_pad + N:conv_pad + N + conv_pad, :] = (
            jnp.zeros((conv_pad, inner), f32))
        vpad_ref[conv_pad:conv_pad + N, :] = v_all.astype(f32)
        wt = wtap_ref[...]                                 # (ks, H*D) f32
        conv = jnp.zeros((N, inner), f32)
        for kk in range(ks):
            conv = conv + wt[kk:kk + 1, :] * vpad_ref[kk:kk + N, :]

        outs = []
        for h in range(H):
            sl = slice(h * D, (h + 1) * D)
            q, k, v = q_all[:, sl], k_all[:, sl], v_all[:, sl]       # bf16 (N, D)
            q_l = qkl[:, h * D:(h + 1) * D]                          # f32 (m, D)
            k_l = qkl[:, inner + h * D: inner + (h + 1) * D]

            attn1 = softmax_rows(dot_bf_rhs_t(q, k_l), approx=True)   # (N, m)
            attn3 = softmax_rows(dot_bf_rhs_t(q_l, k), approx=True)   # (m, N)
            a3v = dot_bf(attn3, v)                                    # (m, D)

            # attn2 + Moore-Penrose iteration (accuracy-critical, 3-pass dots).
            a2 = softmax_rows(dot_3x_rhs_t(q_l, k_l), approx=False)   # (m, m)
            a2t = softmax_cols(dot_3x_rhs_t(k_l, q_l))                # == a2.T
            z = a2t * inv_denom
            for _ in range(iters):
                xz = dot_3x(a2, z)
                t = 7.0 * I_m - xz
                t = 15.0 * I_m - dot_3x(xz, t)
                t = 13.0 * I_m - dot_3x(xz, t)
                z = 0.25 * dot_3x(z, t)

            outs.append(dot_bf(dot_bf(attn1, z), a3v))                # (N, D)

        # Lane-dense epilogue: one full-width (N, H*D) slab store.
        out_all = jnp.concatenate(outs, axis=-1) + conv
        o_ref[0] = out_all.astype(o_ref.dtype)

    return denom_kernel, attn_kernel


# --------------------------- forward wrapper ---------------------------

def nystrom_attention_forward(x, params, *, heads, dim_head, num_landmarks,
                              pinv_iterations=6, residual_conv_kernel=33):
    b, n, dim = x.shape
    m = num_landmarks
    inner = heads * dim_head
    scale = dim_head ** (-0.5)

    remainder = n % m
    if remainder > 0:
        x = jnp.pad(x, ((0, 0), (m - remainder, 0), (0, 0)))   # pad front of seq
    n_pad = x.shape[1]
    l = n_pad // m                                              # == ceil(n / m)

    ks = residual_conv_kernel
    conv_pad = ks // 2

    # Fold the 1/sqrt(d) scale into the q rows of the qkv weight (exact, linear).
    w_qkv = params["w_qkv"]                                     # (3*inner, dim)
    w_qkv = jnp.concatenate([w_qkv[:inner] * scale, w_qkv[inner:]], axis=0)
    w_out = params["w_out"]                                     # (dim, inner)
    b_out = params["b_out"]                                     # (dim,)
    res_w = params["res_w"]                                     # (heads, ks)

    # qkv projection -> lane-dense bf16 (b, n, 3*h*d) activation (no split/transpose).
    qkv = linear_pallas(x.reshape(b * n_pad, dim), w_qkv.T, out_dtype=jnp.bfloat16)
    qkv = qkv.reshape(b, n_pad, 3 * inner)

    # Landmark pooling via linearity: mean-pool x (tiny), project with q/k weights.
    # Neither attention pass re-streams or re-pools the full qkv activation.
    x_pool = x.reshape(b, m, l, dim).mean(axis=2)
    qk_l = linear_pallas(x_pool.reshape(b * m, dim), w_qkv[:2 * inner].T,
                         out_dtype=jnp.float32)
    qk_l = qk_l.reshape(b, m, 2 * inner)

    # Per-tap conv weight table: row kk = res_w[:, kk] broadcast over dim_head lanes.
    w_tap = jnp.repeat(res_w.T, dim_head, axis=1).astype(jnp.float32)  # (ks, inner)
    eye_m = jnp.eye(m, dtype=jnp.float32)

    denom_kernel, attn_kernel = make_attention_kernels(
        heads, n_pad, dim_head, m, ks, conv_pad, pinv_iterations)

    qkl_spec = pl.BlockSpec((1, m, 2 * inner), lambda i: (i, 0, 0))

    # pass 1: global Moore-Penrose denom = max(col-sum) * max(row-sum) of |attn2|.
    maxc, maxr = pl.pallas_call(
        denom_kernel,
        out_shape=[jax.ShapeDtypeStruct((b, 8, 128), jnp.float32),
                   jax.ShapeDtypeStruct((b, 8, 128), jnp.float32)],
        grid=(b,),
        in_specs=[qkl_spec],
        out_specs=[pl.BlockSpec((1, 8, 128), lambda i: (i, 0, 0)),
                   pl.BlockSpec((1, 8, 128), lambda i: (i, 0, 0))],
        compiler_params=pltpu.CompilerParams(
            dimension_semantics=("parallel",)),
    )(qk_l)
    denom = (jnp.max(maxc) * jnp.max(maxr)).reshape(1, 1).astype(jnp.float32)

    # pass 2 VMEM budget: double-buffered blocks + conv scratch, with headroom.
    blk_bytes = (2 * (n_pad * 3 * inner * 2)            # qkv block (bf16) x2
                 + 2 * (n_pad * inner * 2)              # output block (bf16) x2
                 + 2 * (m * 2 * inner * 4)              # landmarks x2
                 + 2 * (ks * inner * 4)                 # conv tap table x2
                 + 2 * (m * m * 4)                      # identity x2
                 + (n_pad + 2 * conv_pad) * inner * 4)  # conv scratch
    vmem_limit = int(min(100 * 1024 * 1024,
                         max(32 * 1024 * 1024, 1.5 * blk_bytes + (8 << 20))))

    # pass 2: attention + residual conv, gridded over batch, lane-dense output.
    out = pl.pallas_call(
        attn_kernel,
        out_shape=jax.ShapeDtypeStruct((b, n_pad, inner), jnp.bfloat16),
        grid=(b,),
        in_specs=[
            pl.BlockSpec((1, n_pad, 3 * inner), lambda i: (i, 0, 0)),
            qkl_spec,
            pl.BlockSpec((ks, inner), lambda i: (0, 0)),
            pl.BlockSpec((m, m), lambda i: (0, 0)),
            pl.BlockSpec((1, 1), lambda i: (0, 0),
                         memory_space=pltpu.MemorySpace.SMEM),
        ],
        out_specs=pl.BlockSpec((1, n_pad, inner), lambda i: (i, 0, 0)),
        scratch_shapes=[pltpu.VMEM((n_pad + 2 * conv_pad, inner), jnp.float32)],
        compiler_params=pltpu.CompilerParams(
            dimension_semantics=("parallel",),
            vmem_limit_bytes=vmem_limit),
    )(qkv, qk_l, w_tap, eye_m, denom)
    # TODO(synk): for very long sequences (v7x's 64 MiB VMEM) add an inner seq-tile
    # grid axis (online softmax for attn3 + halo for the conv) so the per-step
    # whole-sequence block stays bounded.

    # output projection (+ bias); Dropout(p=0) is the identity.
    out2d = linear_pallas(out.reshape(b * n_pad, inner), w_out.T, b_out,
                          out_dtype=jnp.float32)
    out = out2d.reshape(b, n_pad, dim)
    # TODO(synk): mask path and return_attn branch of the torch module not implemented.
    return out[:, -n:]


# --------------------------- pure-JAX reference (mirrors torch module) ---------------------------

def reference_forward(x, params, *, heads, dim_head, num_landmarks,
                      pinv_iterations=6, residual_conv_kernel=33):
    b, n, dim = x.shape
    m = num_landmarks
    h = heads
    scale = dim_head ** (-0.5)
    remainder = n % m
    if remainder > 0:
        padding = m - remainder
        x = jnp.pad(x, ((0, 0), (padding, 0), (0, 0)))
    n_pad = x.shape[1]
    qkv = x @ params["w_qkv"].T
    q, k, v = jnp.split(qkv, 3, axis=-1)

    def to_heads(t):
        return t.reshape(b, n_pad, h, dim_head).transpose(0, 2, 1, 3)
    q, k, v = map(to_heads, (q, k, v))
    q = q * scale
    l = ceil(n / m)
    q_l = q.reshape(b, h, m, l, dim_head).sum(3) / l
    k_l = k.reshape(b, h, m, l, dim_head).sum(3) / l
    attn1 = jax.nn.softmax(jnp.einsum('bhid,bhjd->bhij', q, k_l), axis=-1)
    attn2 = jax.nn.softmax(jnp.einsum('bhid,bhjd->bhij', q_l, k_l), axis=-1)
    attn3 = jax.nn.softmax(jnp.einsum('bhid,bhjd->bhij', q_l, k), axis=-1)
    a = attn2
    abs_a = jnp.abs(a)
    col = abs_a.sum(-1)
    row = abs_a.sum(-2)
    z = jnp.swapaxes(a, -1, -2) / (jnp.max(col) * jnp.max(row))
    I = jnp.eye(m)[None, None]
    for _ in range(pinv_iterations):
        xz = a @ z
        z = 0.25 * z @ (13 * I - xz @ (15 * I - xz @ (7 * I - xz)))
    out = attn1 @ z @ (attn3 @ v)
    ks = residual_conv_kernel
    pad = ks // 2
    w = params["res_w"]
    vp = jnp.pad(v, ((0, 0), (0, 0), (pad, pad), (0, 0)))
    conv = jnp.zeros_like(v)
    for kk in range(ks):
        conv = conv + w[:, kk][None, :, None, None] * vp[:, :, kk:kk + n_pad, :]
    out = out + conv
    out = out.transpose(0, 2, 1, 3).reshape(b, n_pad, h * dim_head)
    out = out @ params["w_out"].T + params["b_out"]
    return out[:, -n:]


# --------------------------- main ---------------------------

if __name__ == "__main__":
    b, n, dim = 2, 10, 32
    heads, dim_head = 4, 8
    num_landmarks = 4
    pinv_iterations = 6
    residual_conv_kernel = 33
    inner = heads * dim_head

    key = jax.random.PRNGKey(0)
    kx, k1, k2, k3, k4 = jax.random.split(key, 5)
    x = jax.random.normal(kx, (b, n, dim), jnp.float32)
    params = {
        "w_qkv": 0.02 * jax.random.normal(k1, (3 * inner, dim), jnp.float32),
        "w_out": 0.02 * jax.random.normal(k2, (dim, inner), jnp.float32),
        "b_out": 0.02 * jax.random.normal(k3, (dim,), jnp.float32),
        "res_w": 0.02 * jax.random.normal(k4, (heads, residual_conv_kernel), jnp.float32),
    }

    out = nystrom_attention_forward(
        x, params, heads=heads, dim_head=dim_head, num_landmarks=num_landmarks,
        pinv_iterations=pinv_iterations, residual_conv_kernel=residual_conv_kernel)
    out = jax.block_until_ready(out)
    assert out.shape == (b, n, dim)

    with jax.default_matmul_precision("highest"):
        ref = reference_forward(
            x, params, heads=heads, dim_head=dim_head, num_landmarks=num_landmarks,
            pinv_iterations=pinv_iterations, residual_conv_kernel=residual_conv_kernel)
    ref = jax.block_until_ready(ref)

    err = jnp.max(jnp.abs(out - ref))
    assert jnp.allclose(out, ref, atol=5e-3, rtol=5e-3), f"max abs err {err}"
    print("KERNEL_OK")
</pallas_src>

<mosaic_0001>
module attributes {stable_mosaic.version = 11 : i64} {
  func.func @_matmul_kernel(%arg0: i32, %arg1: i32, %arg2: i32, %arg3: memref<24x128xbf16, #tpu.memory_space<vmem>>, %arg4: memref<128x128xbf16, #tpu.memory_space<vmem>>, %arg5: memref<24x128xbf16, #tpu.memory_space<vmem>>, %arg6: memref<24x128xf32, #tpu.memory_space<vmem>>) attributes {dimension_semantics = [#tpu.dimension_semantics<parallel>, #tpu.dimension_semantics<parallel>, #tpu.dimension_semantics<arbitrary>], iteration_bounds = array<i64: 1, 1, 1>, scalar_prefetch = 0 : i64, scratch_operands = 1 : i64, tpu.core_type = #tpu.core_type<tc>, window_params = [{transform_indices = @transform_0, window_bounds = array<i64: 24, 128>}, {transform_indices = @transform_1, window_bounds = array<i64: 128, 128>}, {transform_indices = @transform_2, window_bounds = array<i64: 24, 128>}]} {
    %c0_i32 = arith.constant 0 : i32
    %0 = arith.cmpi eq, %arg2, %c0_i32 : i32
    %1 = arith.extui %0 : i1 to i32
    %c0_i32_0 = arith.constant 0 : i32
    %2 = arith.cmpi ne, %1, %c0_i32_0 : i32
    scf.if %2 {
      %cst_10 = arith.constant 0.000000e+00 : f32
      %12 = vector.broadcast %cst_10 : f32 to vector<24x128xf32>
      %c0_11 = arith.constant 0 : index
      %c0_12 = arith.constant 0 : index
      %13 = vector.load %arg6[%c0_11, %c0_12] : memref<24x128xf32, #tpu.memory_space<vmem>>, vector<24x128xf32>
      tpu.vector_store %arg6[%c0_11, %c0_12], %12 {strides = array<i32>} : memref<24x128xf32, #tpu.memory_space<vmem>>, vector<24x128xf32>,
    } else {
    }
    %c0 = arith.constant 0 : index
    %c0_1 = arith.constant 0 : index
    %3 = vector.load %arg6[%c0, %c0_1] : memref<24x128xf32, #tpu.memory_space<vmem>>, vector<24x128xf32>
    %c0_2 = arith.constant 0 : index
    %c0_3 = arith.constant 0 : index
    %4 = vector.load %arg3[%c0_2, %c0_3] : memref<24x128xbf16, #tpu.memory_space<vmem>>, vector<24x128xbf16>
    %c0_4 = arith.constant 0 : index
    %c0_5 = arith.constant 0 : index
    %5 = vector.load %arg4[%c0_4, %c0_5] : memref<128x128xbf16, #tpu.memory_space<vmem>>, vector<128x128xbf16>
    %cst = arith.constant dense<0.000000e+00> : vector<24x128xf32>
    %6 = tpu.matmul %4, %5, %cst {dimension_numbers = #tpu.dot_dimension_numbers<[1], [0], [0], [1], [0, 0, 1, 1], [], []>} : vector<24x128xbf16>, vector<128x128xbf16>, vector<24x128xf32> -> vector<24x128xf32>
    %7 = arith.addf %3, %6 : vector<24x128xf32>
    %c0_6 = arith.constant 0 : index
    %c0_7 = arith.constant 0 : index
    %8 = vector.load %arg6[%c0_6, %c0_7] : memref<24x128xf32, #tpu.memory_space<vmem>>, vector<24x128xf32>
    tpu.vector_store %arg6[%c0_6, %c0_7], %7 {strides = array<i32>} : memref<24x128xf32, #tpu.memory_space<vmem>>, vector<24x128xf32>,
    %c0_i32_8 = arith.constant 0 : i32
    %9 = arith.cmpi eq, %arg2, %c0_i32_8 : i32
    %10 = arith.extui %9 : i1 to i32
    %c0_i32_9 = arith.constant 0 : i32
    %11 = arith.cmpi ne, %10, %c0_i32_9 : i32
    scf.if %11 {
      %c0_10 = arith.constant 0 : index
      %c0_11 = arith.constant 0 : index
      %12 = vector.load %arg6[%c0_10, %c0_11] : memref<24x128xf32, #tpu.memory_space<vmem>>, vector<24x128xf32>
      %13 = arith.truncf %12 : vector<24x128xf32> to vector<24x128xbf16>
      %c0_12 = arith.constant 0 : index
      %c0_13 = arith.constant 0 : index
      %14 = vector.load %arg5[%c0_12, %c0_13] : memref<24x128xbf16, #tpu.memory_space<vmem>>, vector<24x128xbf16>
      tpu.vector_store %arg5[%c0_12, %c0_13], %13 {strides = array<i32>} : memref<24x128xbf16, #tpu.memory_space<vmem>>, vector<24x128xbf16>,
    } else {
    }
    return
  }
  func.func @transform_0(%arg0: i32, %arg1: i32, %arg2: i32) -> (i32, i32) {
    %c0_i32 = arith.constant 0 : i32
    return %arg0, %arg2 : i32, i32
  }
  func.func @transform_1(%arg0: i32, %arg1: i32, %arg2: i32) -> (i32, i32) {
    %c0_i32 = arith.constant 0 : i32
    return %arg2, %arg1 : i32, i32
  }
  func.func @transform_2(%arg0: i32, %arg1: i32, %arg2: i32) -> (i32, i32) {
    %c0_i32 = arith.constant 0 : i32
    return %arg0, %arg1 : i32, i32
  }
}

</mosaic_0001>

<llo_original>
// kernel: tpu_custom_call.1
$region0: #{tpu_custom_call.1}
  #allocation0 [shape = 'u32[]', space=smem, size = 0x4, offset = 0x4, fixed_abs, tag = 'smem constant byte address 0x4 - core index']
  #allocation1 [shape = 'u32[72,128]{1,0:T(1,128)}', space=vmem, size = 0x9000, scoped, tag = 'internal scratch']
  #allocation2 [shape = 'f32[24,128]{1,0:T(8,128)}', space=vmem, size = 0x3000, scoped, tag = 'scratch operand']
  %s0 = inlined_call_operand.hbm [shape: bf16[24,128], index: 0, kind: input, shape index: {}]
  %s1 = inlined_call_operand.hbm [shape: bf16[128,128], index: 1, kind: input, shape index: {}]
  %s2 = inlined_call_operand.hbm [shape: bf16[24,128], index: 2, kind: output, shape index: {}]
  %s3 = sld [smem:[#allocation0]]
  $region34: #{tpu_custom_call.1} parent=0
    _
  %s5 = ssub.s32 1, %s3
  %s6 = scalar_select 0, %s5, %s3
  $region1: #{tpu_custom_call.1} parent=0
    #allocation3 [shape = 'u8[6144]{0}', space=vmem, size = 0x1800, scoped, tag = 'input window, operand 0, single buffered']
    #allocation4 [shape = 's32[1]{0}', space=sflag, size = 0x4, scoped, tag = 'scoped memory for tpu_custom_call.1']
    #allocation5 [shape = 's32[1]{0}', space=sflag, size = 0x4, scoped, tag = 'scoped memory for tpu_custom_call.1']
    #allocation6 [shape = 'u8[32768]{0}', space=vmem, size = 0x8000, scoped, tag = 'input window, operand 1, single buffered']
    #allocation7 [shape = 's32[1]{0}', space=sflag, size = 0x4, scoped, tag = 'scoped memory for tpu_custom_call.1']
    #allocation8 [shape = 'u8[6144]{0}', space=vmem, size = 0x1800, scoped, tag = 'output window, operand 0, single buffered']
    %7 = vsyncpa [#allocation4], 0
    %8 = vsyncpa [#allocation7], 0
    %9 = vsyncpa [#allocation5], 0
    // Predicated region
    $region2: #{tpu_custom_call.1} parent=1 // pred_check
      _
    $region3: #{tpu_custom_call.1} parent=1 // pred_check_branch
      %11 = sbr.rel (0) target = $region5
    $region4: #{tpu_custom_call.1} parent=1 // pred_region
      %13 = vsyncadd [#allocation4], 0
      %s14 = sshll.u32 %s0, 4
      %s15 = int_to_ptr.hbm [resolvable:$true] %s14
      %s16 = sshll.u32 [#allocation3], 4
      %s17 = int_to_ptr.vmem [resolvable:$true] %s16
      %22 = dma.hbm_to_vmem [thread:$0]  %s15, 192, %s17, [#allocation4], 64, 64, 4
    $region5: #{tpu_custom_call.1} parent=1 // pred_fallthru
      _
    // Predicated region
    $region6: #{tpu_custom_call.1} parent=1 // pred_check
      _
    $region7: #{tpu_custom_call.1} parent=1 // pred_check_branch
      %24 = sbr.rel (0) target = $region9
    $region8: #{tpu_custom_call.1} parent=1 // pred_region
      %26 = vsyncadd [#allocation7], 0
      %s27 = sshll.u32 %s1, 4
      %s28 = int_to_ptr.hbm [resolvable:$true] %s27
      %s29 = sshll.u32 [#allocation6], 4
      %s30 = int_to_ptr.vmem [resolvable:$true] %s29
      %35 = dma.hbm_to_vmem [thread:$0]  %s28, 1024, %s30, [#allocation7], 64, 64, 4
    $region9: #{tpu_custom_call.1} parent=1 // pred_fallthru
      _
    // Predicated region
    $region10: #{tpu_custom_call.1} parent=1 // pred_check
      _
    $region11: #{tpu_custom_call.1} parent=1 // pred_check_branch
      %37 = sbr.rel (0) target = $region13
    $region12: #{tpu_custom_call.1} parent=1 // pred_region
      %39 = dma.done [#allocation4], 192
    $region13: #{tpu_custom_call.1} parent=1 // pred_fallthru
      _
    // Predicated region
    $region14: #{tpu_custom_call.1} parent=1 // pred_check
      _
    $region15: #{tpu_custom_call.1} parent=1 // pred_check_branch
      %41 = sbr.rel (0) target = $region17
    $region16: #{tpu_custom_call.1} parent=1 // pred_region
      %43 = dma.done [#allocation7], 1024
    $region17: #{tpu_custom_call.1} parent=1 // pred_fallthru
      _
    %p44 = scmp.eq.s32.totalorder 0, 0
    // Predicated region
    $region18: #{tpu_custom_call.1} parent=1 // pred_check
      %p45 = pneg %p44
    $region19: #{tpu_custom_call.1} parent=1 // pred_check_branch
      %47 = sbr.rel (%p45) target = $region21
    $region20: #{tpu_custom_call.1} parent=1 // pred_region
      %48 = vst [vmem:[#allocation2] sm:$0xff] 0.0
      %49 = vst [vmem:[#allocation2 + $0x8] sm:$0xff] 0.0
      %50 = vst [vmem:[#allocation2 + $0x10] sm:$0xff] 0.0
    $region21: #{tpu_custom_call.1} parent=1 // pred_fallthru
      _
    %v51 = vld [vmem:[#allocation2] sm:$0xff]
    %v52 = vld [vmem:[#allocation2 + $0x8] sm:$0xff]
    %v53 = vld [vmem:[#allocation2 + $0x10] sm:$0xff]
    %v54 = vld [vmem:[#allocation3] sm:$0xf]
    %v55 = vld [vmem:[#allocation3 + $0x4] sm:$0xf]
    %v56 = vld [vmem:[#allocation3 + $0x8] sm:$0xf]
    %v57 = vld [vmem:[#allocation6] sm:$0xf]
    %v58 = vld [vmem:[#allocation6 + $0x4] sm:$0xf]
    %v59 = vld [vmem:[#allocation6 + $0x8] sm:$0xf]
    %v60 = vld [vmem:[#allocation6 + $0xc] sm:$0xf]
    %v61 = vld [vmem:[#allocation6 + $0x10] sm:$0xf]
    %v62 = vld [vmem:[#allocation6 + $0x14] sm:$0xf]
    %v63 = vld [vmem:[#allocation6 + $0x18] sm:$0xf]
    %v64 = vld [vmem:[#allocation6 + $0x1c] sm:$0xf]
    %v65 = vld [vmem:[#allocation6 + $0x20] sm:$0xf]
    %v66 = vld [vmem:[#allocation6 + $0x24] sm:$0xf]
    %v67 = vld [vmem:[#allocation6 + $0x28] sm:$0xf]
    %v68 = vld [vmem:[#allocation6 + $0x2c] sm:$0xf]
    %v69 = vld [vmem:[#allocation6 + $0x30] sm:$0xf]
    %v70 = vld [vmem:[#allocation6 + $0x34] sm:$0xf]
    %v71 = vld [vmem:[#allocation6 + $0x38] sm:$0xf]
    %v72 = vld [vmem:[#allocation6 + $0x3c] sm:$0xf]
    %v76 = vunpack.c.l.b16 %v54
    %v77 = vunpack.c.l.b16 %v55
    %v78 = vunpack.c.l.b16 %v56
    %v79 = vpack.c.b16 %v77, %v76
    %v80 = vpack.c.b16 %v78, %v78
    %v99 = vunpack.c.l.b16 %v57
    %v100 = vunpack.c.l.b16 %v58
    %v101 = vunpack.c.l.b16 %v59
    %v102 = vunpack.c.l.b16 %v60
    %v103 = vunpack.c.l.b16 %v61
    %v104 = vunpack.c.l.b16 %v62
    %v105 = vunpack.c.l.b16 %v63
    %v106 = vunpack.c.l.b16 %v64
    %v107 = vunpack.c.l.b16 %v65
    %v108 = vunpack.c.l.b16 %v66
    %v109 = vunpack.c.l.b16 %v67
    %v110 = vunpack.c.l.b16 %v68
    %v111 = vunpack.c.l.b16 %v69
    %v112 = vunpack.c.l.b16 %v70
    %v113 = vunpack.c.l.b16 %v71
    %v114 = vunpack.c.l.b16 %v72
    %v115 = vpack.c.b16 %v100, %v99
    %v116 = vpack.c.b16 %v102, %v101
    %v117 = vpack.c.b16 %v104, %v103
    %v118 = vpack.c.b16 %v106, %v105
    %v119 = vpack.c.b16 %v108, %v107
    %v120 = vpack.c.b16 %v110, %v109
    %v121 = vpack.c.b16 %v112, %v111
    %v122 = vpack.c.b16 %v114, %v113
    %131 = vmatpush.bf16.msra.mxu0 %v122
    %132 = vmatpush.bf16.msra.mxu0 %v121
    %133 = vmatpush.bf16.msra.mxu0 %v120
    %134 = vmatpush.bf16.msra.mxu0 %v119
    %135 = vmatpush.bf16.msra.mxu0 %v118
    %136 = vmatpush.bf16.msra.mxu0 %v117
    %137 = vmatpush.bf16.msra.mxu0 %v116
    %138 = vmatpush.bf16.msra.mxu0 %v115
    %139 = vmatmul.bf16.gmra.mxu0 %v79
    %v140 = vpop.f32.mrf.mxu0
    %v141 = vadd.f32 0.0, %v140
    %v142 = vpop.f32.mrf.mxu0
    %v143 = vadd.f32 0.0, %v142
    %144 = vmatmul.bf16.gmra.mxu0 %v80
    %v145 = vpop.f32.mrf.mxu0
    %v146 = vadd.f32 0.0, %v145
    %v147 = vpop.f32.mrf.mxu0
    %148 = vdwg.mxu0
    %v149 = vadd.f32 %v51, %v141
    %v150 = vadd.f32 %v52, %v143
    %v151 = vadd.f32 %v53, %v146
    %152 = vst [vmem:[#allocation2] sm:$0xff] %v149
    %153 = vst [vmem:[#allocation2 + $0x8] sm:$0xff] %v150
    %154 = vst [vmem:[#allocation2 + $0x10] sm:$0xff] %v151
    // Predicated region
    $region22: #{tpu_custom_call.1} parent=1 // pred_check
      %p155 = pneg %p44
    $region23: #{tpu_custom_call.1} parent=1 // pred_check_branch
      %157 = sbr.rel (%p155) target = $region25
    $region24: #{tpu_custom_call.1} parent=1 // pred_region
      %v158 = vld [vmem:[#allocation2] sm:$0xff]
      %v159 = vld [vmem:[#allocation2 + $0x8] sm:$0xff]
      %v160 = vld [vmem:[#allocation2 + $0x10] sm:$0xff]
      %v161 = vpack.c.bf16 %v158, %v158
      %v162 = vpack.c.bf16 %v159, %v159
      %v163 = vpack.c.bf16 %v160, %v160
      %164 = vst [vmem:[#allocation8] sm:$0xf] %v161
      %165 = vst [vmem:[#allocation8 + $0x4] sm:$0xf] %v162
      %166 = vst [vmem:[#allocation8 + $0x8] sm:$0xf] %v163
    $region25: #{tpu_custom_call.1} parent=1 // pred_fallthru
      _
    // Predicated region
    $region26: #{tpu_custom_call.1} parent=1 // pred_check
      _
    $region27: #{tpu_custom_call.1} parent=1 // pred_check_branch
      %168 = sbr.rel (0) target = $region29
    $region28: #{tpu_custom_call.1} parent=1 // pred_region
      %170 = vsyncadd [#allocation5], 0
      %s171 = sshll.u32 [#allocation8], 4
      %s172 = int_to_ptr.vmem [resolvable:$true] %s171
      %s173 = sshll.u32 %s2, 4
      %s174 = int_to_ptr.hbm [resolvable:$true] %s173
      %179 = dma.vmem_to_hbm [thread:$0]  %s172, 192, %s174, [#allocation5], 64, 64, 4
    $region29: #{tpu_custom_call.1} parent=1 // pred_fallthru
      _
    // Predicated region
    $region30: #{tpu_custom_call.1} parent=1 // pred_check
      _
    $region31: #{tpu_custom_call.1} parent=1 // pred_check_branch
      %181 = sbr.rel (0) target = $region33
    $region32: #{tpu_custom_call.1} parent=1 // pred_region
      %183 = dma.done [#allocation5], 192
    $region33: #{tpu_custom_call.1} parent=1 // pred_fallthru
      _
    %184 = vsyncpa [#allocation4], 1
    %185 = vsyncpa [#allocation7], 1
    %186 = vsyncpa [#allocation5], 1

</llo_original>
